<compile_context>
chip_gen: v6e
topology: v6e:2x2x1
jax: 0.10.0
libtpu: 0.0.40
codegen_flags: <defaults>
</compile_context>

<pallas_src>
import functools

import jax
import jax.numpy as jnp
from jax.experimental import pallas as pl
from jax.experimental.pallas import tpu as pltpu


def lrn_kernel(x_ref, o_ref, *, local_size, alpha, beta, channels):
    # x_ref / o_ref: (rows, tile_hw) VMEM tiles, rows = nb * channels
    x = x_ref[...].astype(jnp.float32)          # upcast once; I/O stays in x dtype
    sq = x * x
    rows = x.shape[0]

    if local_size > 1:
        pad = (local_size - 1) // 2
        # channel index of each sublane row within its batch element
        chan = jax.lax.broadcasted_iota(jnp.int32, sq.shape, 0) % channels
        acc = sq
        for d in range(1, pad + 1):
            # neighbor at c + d : sublane rotation (XLU slot) + edge mask (VALU)
            up = pltpu.roll(sq, shift=(rows - d) % rows, axis=0)
            acc = acc + jnp.where(chan < channels - d, up, 0.0)
            # neighbor at c - d
            dn = pltpu.roll(sq, shift=d % rows, axis=0)
            acc = acc + jnp.where(chan >= d, dn, 0.0)
    else:
        acc = sq

    t = acc * (alpha / local_size) + 1.0
    if beta == 0.75:
        r = jax.lax.rsqrt(t)                    # t^-0.5
        inv_div = r * jnp.sqrt(r)               # t^-0.75 : no log/exp, no divide
    else:
        inv_div = jnp.exp(-beta * jnp.log(t))   # t^-beta

    o_ref[...] = (x * inv_div).astype(o_ref.dtype)


def lrn_pallas(x, local_size=1, alpha=1.0, beta=0.75):
    """Across-channel LRN matching the PyTorch module forward (ACROSS_CHANNELS=True)."""
    # TODO(synk): ACROSS_CHANNELS=False (2D spatial avg-pool variant) not implemented.
    if local_size % 2 != 1:
        # torch's AvgPool3d with padding=(local_size-1)//2 changes the channel
        # extent for even windows (forward would not even broadcast) — only the
        # standard odd-window LRN is supported.
        raise ValueError("local_size must be odd")

    N, C, H, W = x.shape
    HW = H * W

    # Lane axis: tile H*W in multiples of 128 (pad if needed) -> lane-dense stores.
    LANE = 128
    tile_hw = min(((HW + LANE - 1) // LANE) * LANE, 2048)
    HW_pad = ((HW + tile_hw - 1) // tile_hw) * tile_hw

    xf = x.reshape(N, C, HW)
    if HW_pad != HW:
        xf = jnp.pad(xf, ((0, 0), (0, 0), (0, HW_pad - HW)))
    xf = xf.reshape(N * C, HW_pad)   # free reshape: channels on sublanes

    # Batch axis: fold several batch elements per block (~1 MiB f32 per block),
    # keeping the sublane block extent a multiple of 8 (or the full extent).
    target_rows = max(1, (1 << 20) // (4 * tile_hw))
    nb = 1
    for cand in range(min(N, max(1, target_rows // C)), 0, -1):
        if N % cand == 0 and ((cand * C) % 8 == 0 or cand == N):
            nb = cand
            break
    if (nb * C) % 8 != 0:
        nb = N                                   # block = full sublane extent

    rows = nb * C
    grid = (N // nb, HW_pad // tile_hw)          # both axes fully parallel

    kern = functools.partial(
        lrn_kernel, local_size=local_size, alpha=alpha, beta=beta, channels=C)
    out = pl.pallas_call(
        kern,
        out_shape=jax.ShapeDtypeStruct((N * C, HW_pad), x.dtype),
        grid=grid,
        in_specs=[pl.BlockSpec((rows, tile_hw), lambda n, h: (n, h))],
        out_specs=pl.BlockSpec((rows, tile_hw), lambda n, h: (n, h)),
        compiler_params=pltpu.CompilerParams(
            dimension_semantics=("parallel", "parallel")),
    )(xf)

    out = out.reshape(N, C, HW_pad)[:, :, :HW]
    return out.reshape(N, C, H, W)


def lrn_ref(x, local_size, alpha, beta):
    """Pure-JAX reference mirroring torch AvgPool3d((k,1,1), stride=1, pad=((k-1)//2,0,0))."""
    sq = (x * x).astype(jnp.float32)
    pad = (local_size - 1) // 2
    padded = jnp.pad(sq, ((0, 0), (pad, local_size - 1 - pad), (0, 0), (0, 0)))
    acc = sum(padded[:, d:d + x.shape[1]] for d in range(local_size))
    div = (acc * (alpha / local_size) + 1.0) ** beta
    return x.astype(jnp.float32) / div


if __name__ == "__main__":
    key = jax.random.PRNGKey(0)
    N, C, H, W = 2, 8, 16, 16
    x = jax.random.normal(key, (N, C, H, W), dtype=jnp.float32)

    # AlexNet-style hyperparameters
    local_size, alpha, beta = 5, 1e-4, 0.75
    out = jax.block_until_ready(lrn_pallas(x, local_size=local_size, alpha=alpha, beta=beta))
    ref = lrn_ref(x, local_size, alpha, beta)
    assert out.shape == x.shape and out.dtype == x.dtype
    assert jnp.allclose(out, ref, atol=1e-5, rtol=1e-5)

    # module default config (local_size=1, alpha=1.0, beta=0.75)
    out_default = jax.block_until_ready(lrn_pallas(x))
    assert jnp.allclose(out_default, lrn_ref(x, 1, 1.0, 0.75), atol=1e-5, rtol=1e-5)

    # non-0.75 beta exercises the exp/log path
    out_b = jax.block_until_ready(lrn_pallas(x, local_size=3, alpha=2e-4, beta=0.5))
    assert jnp.allclose(out_b, lrn_ref(x, 3, 2e-4, 0.5), atol=1e-5, rtol=1e-5)

    # bf16 I/O: arithmetic upcast to f32 inside the kernel, cast back at the store
    xb = x.astype(jnp.bfloat16)
    out_bf = jax.block_until_ready(lrn_pallas(xb, local_size=5, alpha=1e-4, beta=0.75))
    assert out_bf.dtype == jnp.bfloat16
    ref_bf = lrn_ref(xb.astype(jnp.float32), 5, 1e-4, 0.75)
    assert jnp.allclose(out_bf.astype(jnp.float32), ref_bf, atol=2e-2, rtol=2e-2)

    print("KERNEL_OK")
</pallas_src>

<mosaic_0001>
module attributes {stable_mosaic.version = 11 : i64} {
  func.func @lrn_kernel(%arg0: i32, %arg1: i32, %arg2: memref<16x256xf32, #tpu.memory_space<vmem>>, %arg3: memref<16x256xf32, #tpu.memory_space<vmem>>) attributes {dimension_semantics = [#tpu.dimension_semantics<parallel>, #tpu.dimension_semantics<parallel>], iteration_bounds = array<i64: 1, 1>, scalar_prefetch = 0 : i64, scratch_operands = 0 : i64, tpu.core_type = #tpu.core_type<tc>, window_params = [{transform_indices = @transform_0, window_bounds = array<i64: 16, 256>}, {transform_indices = @transform_1, window_bounds = array<i64: 16, 256>}]} {
    %c0 = arith.constant 0 : index
    %c0_0 = arith.constant 0 : index
    %0 = vector.load %arg2[%c0, %c0_0] : memref<16x256xf32, #tpu.memory_space<vmem>>, vector<16x256xf32>
    %1 = arith.mulf %0, %0 : vector<16x256xf32>
    %2 = tpu.iota {dimensions = array<i32: 0>} : vector<16x256xi32>
    %c8_i32 = arith.constant 8 : i32
    %c0_i32 = arith.constant 0 : i32
    %3 = arith.cmpi eq, %c8_i32, %c0_i32 : i32
    %c1_i32 = arith.constant 1 : i32
    %4 = arith.select %3, %c1_i32, %c8_i32 : i32
    %5 = vector.broadcast %4 : i32 to vector<16x256xi32>
    %6 = arith.remsi %2, %5 : vector<16x256xi32>
    %c0_i32_1 = arith.constant 0 : i32
    %7 = vector.broadcast %c0_i32_1 : i32 to vector<16x256xi32>
    %8 = arith.cmpi ne, %6, %7 : vector<16x256xi32>
    %c0_i32_2 = arith.constant 0 : i32
    %9 = vector.broadcast %c0_i32_2 : i32 to vector<16x256xi32>
    %10 = arith.cmpi slt, %6, %9 : vector<16x256xi32>
    %c0_i32_3 = arith.constant 0 : i32
    %11 = arith.cmpi slt, %4, %c0_i32_3 : i32
    %12 = vector.broadcast %11 : i1 to vector<16x256xi1>
    %13 = vector.broadcast %12 : vector<16x256xi1> to vector<16x256xi1>
    %14 = arith.xori %10, %13 : vector<16x256xi1>
    %15 = arith.andi %14, %8 : vector<16x256xi1>
    %16 = vector.broadcast %4 : i32 to vector<16x256xi32>
    %17 = arith.addi %6, %16 : vector<16x256xi32>
    %18 = arith.select %15, %17, %6 : vector<16x256xi1>, vector<16x256xi32>
    %c15_i32 = arith.constant 15 : i32
    %19 = tpu.dynamic_rotate %1 by %c15_i32 dim 0 : vector<16x256xf32>, i32 -> vector<16x256xf32>
    %c7_i32 = arith.constant 7 : i32
    %20 = vector.broadcast %c7_i32 : i32 to vector<16x256xi32>
    %21 = arith.cmpi slt, %18, %20 : vector<16x256xi32>
    %cst = arith.constant 0.000000e+00 : f32
    %22 = vector.broadcast %cst : f32 to vector<16x256xf32>
    %23 = arith.select %21, %19, %22 : vector<16x256xi1>, vector<16x256xf32>
    %24 = arith.addf %1, %23 : vector<16x256xf32>
    %c1_i32_4 = arith.constant 1 : i32
    %25 = tpu.dynamic_rotate %1 by %c1_i32_4 dim 0 : vector<16x256xf32>, i32 -> vector<16x256xf32>
    %c1_i32_5 = arith.constant 1 : i32
    %26 = vector.broadcast %c1_i32_5 : i32 to vector<16x256xi32>
    %27 = arith.cmpi sge, %18, %26 : vector<16x256xi32>
    %cst_6 = arith.constant 0.000000e+00 : f32
    %28 = vector.broadcast %cst_6 : f32 to vector<16x256xf32>
    %29 = arith.select %27, %25, %28 : vector<16x256xi1>, vector<16x256xf32>
    %30 = arith.addf %24, %29 : vector<16x256xf32>
    %c14_i32 = arith.constant 14 : i32
    %31 = tpu.dynamic_rotate %1 by %c14_i32 dim 0 : vector<16x256xf32>, i32 -> vector<16x256xf32>
    %c6_i32 = arith.constant 6 : i32
    %32 = vector.broadcast %c6_i32 : i32 to vector<16x256xi32>
    %33 = arith.cmpi slt, %18, %32 : vector<16x256xi32>
    %cst_7 = arith.constant 0.000000e+00 : f32
    %34 = vector.broadcast %cst_7 : f32 to vector<16x256xf32>
    %35 = arith.select %33, %31, %34 : vector<16x256xi1>, vector<16x256xf32>
    %36 = arith.addf %30, %35 : vector<16x256xf32>
    %c2_i32 = arith.constant 2 : i32
    %37 = tpu.dynamic_rotate %1 by %c2_i32 dim 0 : vector<16x256xf32>, i32 -> vector<16x256xf32>
    %c2_i32_8 = arith.constant 2 : i32
    %38 = vector.broadcast %c2_i32_8 : i32 to vector<16x256xi32>
    %39 = arith.cmpi sge, %18, %38 : vector<16x256xi32>
    %cst_9 = arith.constant 0.000000e+00 : f32
    %40 = vector.broadcast %cst_9 : f32 to vector<16x256xf32>
    %41 = arith.select %39, %37, %40 : vector<16x256xi1>, vector<16x256xf32>
    %42 = arith.addf %36, %41 : vector<16x256xf32>
    %cst_10 = arith.constant 2.000000e-05 : f32
    %43 = vector.broadcast %cst_10 : f32 to vector<16x256xf32>
    %44 = arith.mulf %42, %43 : vector<16x256xf32>
    %cst_11 = arith.constant 1.000000e+00 : f32
    %45 = vector.broadcast %cst_11 : f32 to vector<16x256xf32>
    %46 = arith.addf %44, %45 : vector<16x256xf32>
    %47 = math.rsqrt %46 : vector<16x256xf32>
    %48 = math.sqrt %47 : vector<16x256xf32>
    %49 = arith.mulf %47, %48 : vector<16x256xf32>
    %50 = arith.mulf %0, %49 : vector<16x256xf32>
    %c0_12 = arith.constant 0 : index
    %c0_13 = arith.constant 0 : index
    %51 = vector.load %arg3[%c0_12, %c0_13] : memref<16x256xf32, #tpu.memory_space<vmem>>, vector<16x256xf32>
    tpu.vector_store %arg3[%c0_12, %c0_13], %50 {strides = array<i32>} : memref<16x256xf32, #tpu.memory_space<vmem>>, vector<16x256xf32>,
    return
  }
  func.func @transform_0(%arg0: i32, %arg1: i32) -> (i32, i32) {
    %c0_i32 = arith.constant 0 : i32
    return %arg0, %arg1 : i32, i32
  }
  func.func @transform_1(%arg0: i32, %arg1: i32) -> (i32, i32) {
    %c0_i32 = arith.constant 0 : i32
    return %arg0, %arg1 : i32, i32
  }
}

</mosaic_0001>

<llo_original>
// kernel: tpu_custom_call.1
$region0: #{tpu_custom_call.1}
  #allocation0 [shape = 'u32[]', space=smem, size = 0x4, offset = 0x4, fixed_abs, tag = 'smem constant byte address 0x4 - core index']
  #allocation1 [shape = 'u32[144,128]{1,0:T(1,128)}', space=vmem, size = 0x12000, scoped, tag = 'internal scratch']
  %s0 = inlined_call_operand.hbm [shape: f32[16,256], index: 0, kind: input, shape index: {}]
  %s1 = inlined_call_operand.hbm [shape: f32[16,256], index: 1, kind: output, shape index: {}]
  %s2 = sld [smem:[#allocation0]]
  $region18: #{tpu_custom_call.1} parent=0
    _
  %s4 = ssub.s32 1, %s2
  %s5 = scalar_select 0, %s4, %s2
  $region1: #{tpu_custom_call.1} parent=0
    #allocation2 [shape = 'u8[16384]{0}', space=vmem, size = 0x4000, scoped, tag = 'input window, operand 0, single buffered']
    #allocation3 [shape = 's32[1]{0}', space=sflag, size = 0x4, scoped, tag = 'scoped memory for tpu_custom_call.1']
    #allocation4 [shape = 's32[1]{0}', space=sflag, size = 0x4, scoped, tag = 'scoped memory for tpu_custom_call.1']
    #allocation5 [shape = 'u8[16384]{0}', space=vmem, size = 0x4000, scoped, tag = 'output window, operand 0, single buffered']
    %6 = vsyncpa [#allocation3], 0
    %7 = vsyncpa [#allocation4], 0
    // Predicated region
    $region2: #{tpu_custom_call.1} parent=1 // pred_check
      _
    $region3: #{tpu_custom_call.1} parent=1 // pred_check_branch
      %9 = sbr.rel (0) target = $region5
    $region4: #{tpu_custom_call.1} parent=1 // pred_region
      %s11 = ssub.s32 512, 512
      %12 = vsyncadd [#allocation3], %s11
      %s13 = sshll.u32 [#allocation2], 4
      %s14 = int_to_ptr.vmem [resolvable:$true] %s13
      %19 = dma.hbm_to_vmem [thread:$0]  %s0, 512, %s14, [#allocation3], 256, 256, 16
    $region5: #{tpu_custom_call.1} parent=1 // pred_fallthru
      _
    // Predicated region
    $region6: #{tpu_custom_call.1} parent=1 // pred_check
      _
    $region7: #{tpu_custom_call.1} parent=1 // pred_check_branch
      %21 = sbr.rel (0) target = $region9
    $region8: #{tpu_custom_call.1} parent=1 // pred_region
      %22 = dma.done [#allocation3], 512
    $region9: #{tpu_custom_call.1} parent=1 // pred_fallthru
      _
    %v23 = vld [vmem:[#allocation2] sm:$0xff]
    %v24 = vld [vmem:[#allocation2 + $0x8] sm:$0xff]
    %v25 = vld [vmem:[#allocation2 + $0x10] sm:$0xff]
    %v26 = vld [vmem:[#allocation2 + $0x18] sm:$0xff]
    %v27 = vmul.f32 %v23, %v23
    %v28 = vmul.f32 %v24, %v24
    %v29 = vmul.f32 %v25, %v25
    %v30 = vmul.f32 %v26, %v26
    %v31 = vlaneseq
    %v32 = vshrl.u32 %v31, 7
    %v33 = vadd.s32 %v32, 8
    %vm34 = vcmp.lt.s32.totalorder %v32, 0
    %v35 = vsub.s32 0, %v32
    %v36 = vsel %vm34, %v35, %v32
    %v37 = vshrl.u32 %v36, 3
    %v38 = vand.u32 %v36, 7
    %v39 = vsub.s32 0, %v38
    %v40 = vsel %vm34, %v39, %v38
    %vm41 = vcmp.lt.s32.totalorder %v33, 0
    %v42 = vsub.s32 0, %v33
    %v43 = vsel %vm41, %v42, %v33
    %v44 = vshrl.u32 %v43, 3
    %v45 = vand.u32 %v43, 7
    %v46 = vsub.s32 0, %v45
    %v47 = vsel %vm41, %v46, %v45
    %vm48 = vcmp.ne.s32.totalorder %v40, 0
    %vm49 = vcmp.ne.s32.totalorder %v47, 0
    %vm50 = vcmp.lt.s32.totalorder %v40, 0
    %vm51 = vcmp.lt.s32.totalorder %v47, 0
    %vm52 = vmand %vm50, %vm48
    %vm53 = vmand %vm51, %vm49
    %v54 = vadd.s32 %v40, 8
    %v55 = vadd.s32 %v47, 8
    %v56 = vsel %vm52, %v54, %v40
    %v57 = vsel %vm53, %v55, %v47
    %v58 = vrot.slane %v27, 1
    %v59 = vrot.slane %v28, 1
    %v60 = vrot.slane %v29, 1
    %v61 = vrot.slane %v30, 1
    %vm62 = vcmp.lt.s32.totalorder %v32, 7
    %v63 = vsel %vm62, %v58, %v60
    %v64 = vsel %vm62, %v59, %v61
    %v65 = vsel %vm62, %v60, %v58
    %v66 = vsel %vm62, %v61, %v59
    %vm67 = vcmp.lt.s32.totalorder %v56, 7
    %vm68 = vcmp.lt.s32.totalorder %v57, 7
    %v69 = vsel %vm67, %v63, 0.0
    %v70 = vsel %vm67, %v64, 0.0
    %v71 = vsel %vm68, %v65, 0.0
    %v72 = vsel %vm68, %v66, 0.0
    %v73 = vadd.f32 %v27, %v69
    %v74 = vadd.f32 %v28, %v70
    %v75 = vadd.f32 %v29, %v71
    %v76 = vadd.f32 %v30, %v72
    %v77 = vrot.slane %v27, 7
    %v78 = vrot.slane %v28, 7
    %v79 = vrot.slane %v29, 7
    %v80 = vrot.slane %v30, 7
    %vm81 = vcmp.lt.s32.totalorder %v32, 1
    %v82 = vsel %vm81, %v77, %v79
    %v83 = vsel %vm81, %v78, %v80
    %v84 = vsel %vm81, %v79, %v77
    %v85 = vsel %vm81, %v80, %v78
    %vm86 = vcmp.ge.s32.totalorder %v56, 1
    %vm87 = vcmp.ge.s32.totalorder %v57, 1
    %v88 = vsel %vm86, %v84, 0.0
    %v89 = vsel %vm86, %v85, 0.0
    %v90 = vsel %vm87, %v82, 0.0
    %v91 = vsel %vm87, %v83, 0.0
    %v92 = vadd.f32 %v73, %v88
    %v93 = vadd.f32 %v74, %v89
    %v94 = vadd.f32 %v75, %v90
    %v95 = vadd.f32 %v76, %v91
    %v96 = vrot.slane %v27, 2
    %v97 = vrot.slane %v28, 2
    %v98 = vrot.slane %v29, 2
    %v99 = vrot.slane %v30, 2
    %vm100 = vcmp.lt.s32.totalorder %v32, 6
    %v101 = vsel %vm100, %v96, %v98
    %v102 = vsel %vm100, %v97, %v99
    %v103 = vsel %vm100, %v98, %v96
    %v104 = vsel %vm100, %v99, %v97
    %vm105 = vcmp.lt.s32.totalorder %v56, 6
    %vm106 = vcmp.lt.s32.totalorder %v57, 6
    %v107 = vsel %vm105, %v101, 0.0
    %v108 = vsel %vm105, %v102, 0.0
    %v109 = vsel %vm106, %v103, 0.0
    %v110 = vsel %vm106, %v104, 0.0
    %v111 = vadd.f32 %v92, %v107
    %v112 = vadd.f32 %v93, %v108
    %v113 = vadd.f32 %v94, %v109
    %v114 = vadd.f32 %v95, %v110
    %v115 = vrot.slane %v27, 6
    %v116 = vrot.slane %v28, 6
    %v117 = vrot.slane %v29, 6
    %v118 = vrot.slane %v30, 6
    %vm119 = vcmp.lt.s32.totalorder %v32, 2
    %v120 = vsel %vm119, %v115, %v117
    %v121 = vsel %vm119, %v116, %v118
    %v122 = vsel %vm119, %v117, %v115
    %v123 = vsel %vm119, %v118, %v116
    %vm124 = vcmp.ge.s32.totalorder %v56, 2
    %vm125 = vcmp.ge.s32.totalorder %v57, 2
    %v126 = vsel %vm124, %v122, 0.0
    %v127 = vsel %vm124, %v123, 0.0
    %v128 = vsel %vm125, %v120, 0.0
    %v129 = vsel %vm125, %v121, 0.0
    %v130 = vadd.f32 %v111, %v126
    %v131 = vadd.f32 %v112, %v127
    %v132 = vadd.f32 %v113, %v128
    %v133 = vadd.f32 %v114, %v129
    %v134 = vmul.f32 %v130, 2e-05
    %v135 = vmul.f32 %v131, 2e-05
    %v136 = vmul.f32 %v132, 2e-05
    %v137 = vmul.f32 %v133, 2e-05
    %v138 = vadd.f32 %v134, 1.0
    %v139 = vadd.f32 %v135, 1.0
    %v140 = vadd.f32 %v136, 1.0
    %v141 = vadd.f32 %v137, 1.0
    %v142 = vrsqrt.pop %v138
    %v143 = vrsqrt.pop %v139
    %v144 = vrsqrt.pop %v140
    %v145 = vrsqrt.pop %v141
    %v146 = vrsqrt.pop %v142
    %v147 = vmul.f32 %v142, %v146
    %vm148 = vcmp.eq.f32.partialorder %v142, inf
    %v149 = vsel %vm148, %v142, %v147
    %vm150 = vcmp.eq.f32.partialorder %v142, 0.0
    %v151 = vand.u32 %v142, 2147483648
    %v152 = vsel %vm150, %v151, %v149
    %v153 = vrsqrt.pop %v143
    %v154 = vmul.f32 %v143, %v153
    %vm155 = vcmp.eq.f32.partialorder %v143, inf
    %v156 = vsel %vm155, %v143, %v154
    %vm157 = vcmp.eq.f32.partialorder %v143, 0.0
    %v158 = vand.u32 %v143, 2147483648
    %v159 = vsel %vm157, %v158, %v156
    %v160 = vrsqrt.pop %v144
    %v161 = vmul.f32 %v144, %v160
    %vm162 = vcmp.eq.f32.partialorder %v144, inf
    %v163 = vsel %vm162, %v144, %v161
    %vm164 = vcmp.eq.f32.partialorder %v144, 0.0
    %v165 = vand.u32 %v144, 2147483648
    %v166 = vsel %vm164, %v165, %v163
    %v167 = vrsqrt.pop %v145
    %v168 = vmul.f32 %v145, %v167
    %vm169 = vcmp.eq.f32.partialorder %v145, inf
    %v170 = vsel %vm169, %v145, %v168
    %vm171 = vcmp.eq.f32.partialorder %v145, 0.0
    %v172 = vand.u32 %v145, 2147483648
    %v173 = vsel %vm171, %v172, %v170
    %v174 = vmul.f32 %v142, %v152
    %v175 = vmul.f32 %v143, %v159
    %v176 = vmul.f32 %v144, %v166
    %v177 = vmul.f32 %v145, %v173
    %v178 = vmul.f32 %v23, %v174
    %v179 = vmul.f32 %v24, %v175
    %v180 = vmul.f32 %v25, %v176
    %v181 = vmul.f32 %v26, %v177
    %182 = vst [vmem:[#allocation5] sm:$0xff] %v178
    %183 = vst [vmem:[#allocation5 + $0x8] sm:$0xff] %v179
    %184 = vst [vmem:[#allocation5 + $0x10] sm:$0xff] %v180
    %185 = vst [vmem:[#allocation5 + $0x18] sm:$0xff] %v181
    // Predicated region
    $region10: #{tpu_custom_call.1} parent=1 // pred_check
      _
    $region11: #{tpu_custom_call.1} parent=1 // pred_check_branch
      %187 = sbr.rel (0) target = $region13
    $region12: #{tpu_custom_call.1} parent=1 // pred_region
      %s189 = ssub.s32 512, 512
      %190 = vsyncadd [#allocation4], %s189
      %s191 = sshll.u32 [#allocation5], 4
      %s192 = int_to_ptr.vmem [resolvable:$true] %s191
      %197 = dma.vmem_to_hbm [thread:$0]  %s192, 512, %s1, [#allocation4], 256, 256, 16
    $region13: #{tpu_custom_call.1} parent=1 // pred_fallthru
      _
    // Predicated region
    $region14: #{tpu_custom_call.1} parent=1 // pred_check
      _
    $region15: #{tpu_custom_call.1} parent=1 // pred_check_branch
      %199 = sbr.rel (0) target = $region17
    $region16: #{tpu_custom_call.1} parent=1 // pred_region
      %200 = dma.done [#allocation4], 512
    $region17: #{tpu_custom_call.1} parent=1 // pred_fallthru
      _
    %201 = vsyncpa [#allocation3], 1
    %202 = vsyncpa [#allocation4], 1

</llo_original>
